<compile_context>
chip_gen: v6e
topology: v6e:2x2x1
jax: 0.10.0
libtpu: 0.0.40
codegen_flags: <defaults>
</compile_context>

<pallas_src>
import jax
import jax.numpy as jnp
from jax import lax
from jax.experimental import pallas as pl
from jax.experimental.pallas import tpu as pltpu


def _round_up(a, m):
    return ((a + m - 1) // m) * m


# --------------------------------------------------------------------------- #
# Pallas kernel: one (TM, TN) output tile, accumulated over K feature chunks.
# --------------------------------------------------------------------------- #
def _odml_dist_kernel(xs_ref, xr_ref, sqc_ref, sqr_ref, o_ref, acc_ref):
    # Read every grid coordinate at the TOP of the body (never inside a
    # pl.when / lax.cond branch): program_id nested in a cond branch has no
    # lowering on the interpret fallback path.
    i = pl.program_id(0)
    kk = pl.program_id(2)
    nk = pl.num_programs(2)
    row_base = i * o_ref.shape[0]          # global row offset of this tile

    @pl.when(kk == 0)
    def _init():
        acc_ref[...] = jnp.zeros_like(acc_ref)

    # MXU-native (TM, K) x (K, TN) matmul, f32 accumulation.
    acc_ref[...] += jnp.dot(xs_ref[...], xr_ref[...],
                            preferred_element_type=jnp.float32)

    @pl.when(kk == nk - 1)
    def _finalize():
        # ||x_i||^2 + ||x_j||^2 - 2 * x_i . x_j  (norms precomputed, f32 epilogue)
        dmat = sqc_ref[...] + (sqr_ref[...] - 2.0 * acc_ref[...])
        # D[0, :] = +inf (range(0, n, n+1) == [0]).  Apply via the global row
        # index — a single iota/compare/select per finalize is trivial VPU work
        # next to the MXU matmul, and it needs no nested pl.when/program_id.
        rows = lax.broadcasted_iota(jnp.int32, dmat.shape, 0) + row_base
        o_ref[...] = jnp.where(rows == 0, jnp.float32(jnp.inf), dmat)


# --------------------------------------------------------------------------- #
# Wrappers
# --------------------------------------------------------------------------- #
def _odml_dist_xla(xr):
    """Plain-XLA f32 reference path (also the fast path for tiny problems)."""
    sq = jnp.sum(xr * xr, axis=0, keepdims=True)                 # (1, n)
    dmat = sq + (jnp.transpose(sq) - 2.0 * (xr.T @ xr))          # (n, n)
    return dmat.at[0, :].set(jnp.inf)


def _odml_dist_pallas(xr, *, matmul_dtype=jnp.bfloat16):
    d, n = int(xr.shape[0]), int(xr.shape[1])

    # ---- tile geometry (lane-dense, 128/256 multiples) ---------------------- #
    n128 = _round_up(n, 128)
    tile_mn = 256 if n128 % 256 == 0 else 128    # 256 feeds the v6e/v7x 256x256 MXU
    n_pad = _round_up(n, tile_mn)
    d128 = _round_up(d, 128)
    tile_k = min(512, d128)
    d_pad = _round_up(d, tile_k)

    # ---- padded operands ----------------------------------------------------- #
    xr_p = jnp.pad(xr, ((0, d_pad - d), (0, n_pad - n)))          # (d_pad, n_pad) f32
    sq = jnp.sum(xr_p * xr_p, axis=0)                             # (n_pad,) f32 norms
    sq_row = sq.reshape(1, n_pad)
    sq_col = sq.reshape(n_pad, 1)
    xs_mm = xr_p.T.astype(matmul_dtype)                           # (n_pad, d_pad) LHS
    xr_mm = xr_p.astype(matmul_dtype)                             # (d_pad, n_pad) RHS

    grid = (n_pad // tile_mn, n_pad // tile_mn, d_pad // tile_k)

    # ---- VMEM budget: 2x-buffered matmul tiles + norms + out + accumulator -- #
    itm = jnp.dtype(matmul_dtype).itemsize
    est = (2 * 2 * tile_mn * tile_k * itm          # lhs + rhs tiles, 2 bufs each
           + 2 * 2 * tile_mn * 4                   # sq row/col tiles
           + 2 * tile_mn * tile_mn * 4             # output tile, 2 bufs
           + tile_mn * tile_mn * 4)                # f32 accumulator
    vmem_limit = int(min(64 * 1024 * 1024, max(16 * 1024 * 1024, 4 * est)))

    d_full = pl.pallas_call(
        _odml_dist_kernel,
        out_shape=jax.ShapeDtypeStruct((n_pad, n_pad), jnp.float32),
        grid_spec=pltpu.PrefetchScalarGridSpec(
            num_scalar_prefetch=0,
            grid=grid,
            in_specs=[
                pl.BlockSpec((tile_mn, tile_k), lambda i, j, kk: (i, kk)),  # LHS (TM,K)
                pl.BlockSpec((tile_k, tile_mn), lambda i, j, kk: (kk, j)),  # RHS (K,TN)
                pl.BlockSpec((tile_mn, 1), lambda i, j, kk: (i, 0)),        # ||.||^2 col
                pl.BlockSpec((1, tile_mn), lambda i, j, kk: (0, j)),        # ||.||^2 row
            ],
            out_specs=pl.BlockSpec((tile_mn, tile_mn), lambda i, j, kk: (i, j)),
            scratch_shapes=[pltpu.VMEM((tile_mn, tile_mn), jnp.float32)],
        ),
        compiler_params=pltpu.CompilerParams(
            dimension_semantics=("parallel", "parallel", "arbitrary"),
            vmem_limit_bytes=vmem_limit,
        ),
    )(xs_mm, xr_mm, sq_col, sq_row)

    return d_full[:n, :n]


def odml_forward(x, y, k=4, v=2, *, use_pallas=None, matmul_dtype=jnp.bfloat16):
    """JAX/Pallas equivalent of ODML(k, v).forward(x, y). Returns (D, T)."""
    n = int(y.shape[0])
    x = jnp.asarray(x, dtype=jnp.float32)
    # Faithful to torch `x = x.reshape(-1, x.shape[0])`: a row-major reshape,
    # NOT a transpose (this reproduces the upstream module exactly).
    xr = jnp.reshape(x, (-1, x.shape[0]))                         # (d, n)

    if use_pallas is None:
        # Tiny problems: pallas_call launch + per-step overhead dominates;
        # plain XLA is strictly faster there.
        use_pallas = n >= 512

    if use_pallas:
        D = _odml_dist_pallas(xr, matmul_dtype=matmul_dtype)
    else:
        D = _odml_dist_xla(xr)

    # Reference allocates T = zeros(3, n*(v+k)^2) and never fills it.
    T = jnp.zeros((3, n * (v + k) * (v + k)), dtype=jnp.float32)
    # TODO(synk): the per-class neighbor-selection loop in the reference
    # (`for i in range(label): for idx in y.shape[0]: ...`) raises TypeError
    # and has no defined semantics to translate.
    return D, T


if __name__ == "__main__":
    key = jax.random.PRNGKey(0)
    kx, ky = jax.random.split(key)
    n, d = 8, 32                       # small shapes: 8 samples, 32 features
    x = jax.random.normal(kx, (n, d), dtype=jnp.float32)
    y = jax.random.randint(ky, (n,), 0, 3)

    # Force the Pallas path so the kernel itself is exercised at demo size.
    D, T = odml_forward(x, y, k=4, v=2, use_pallas=True)
    jax.block_until_ready((D, T))

    # Cross-check against the plain-XLA f32 reference (loose tolerance: the
    # kernel's MXU operands are bf16 with f32 accumulation).
    D_ref, _ = odml_forward(x, y, k=4, v=2, use_pallas=False)
    finite = jnp.isfinite(D_ref)
    max_err = float(jnp.max(jnp.abs(jnp.where(finite, D - D_ref, 0.0))))
    assert max_err < 1.0, f"max |D - D_ref| = {max_err}"
    assert bool(jnp.all(jnp.isinf(D[0, :]))), "row 0 must be +inf"
    assert D.shape == (n, n) and T.shape == (3, n * 36)

    print("KERNEL_OK")
</pallas_src>

<mosaic_0001>
module attributes {stable_mosaic.version = 11 : i64} {
  func.func @_odml_dist_kernel(%arg0: i32, %arg1: i32, %arg2: i32, %arg3: memref<128x128xbf16, #tpu.memory_space<vmem>>, %arg4: memref<128x128xbf16, #tpu.memory_space<vmem>>, %arg5: memref<128x1xf32, #tpu.memory_space<vmem>>, %arg6: memref<1x128xf32, #tpu.memory_space<vmem>>, %arg7: memref<128x128xf32, #tpu.memory_space<vmem>>, %arg8: memref<128x128xf32, #tpu.memory_space<vmem>>) attributes {dimension_semantics = [#tpu.dimension_semantics<parallel>, #tpu.dimension_semantics<parallel>, #tpu.dimension_semantics<arbitrary>], iteration_bounds = array<i64: 1, 1, 1>, scalar_prefetch = 0 : i64, scratch_operands = 1 : i64, tpu.core_type = #tpu.core_type<tc>, window_params = [{transform_indices = @transform_0, window_bounds = array<i64: 128, 128>}, {transform_indices = @transform_1, window_bounds = array<i64: 128, 128>}, {transform_indices = @transform_2, window_bounds = array<i64: 128, 1>}, {transform_indices = @transform_3, window_bounds = array<i64: 1, 128>}, {transform_indices = @transform_4, window_bounds = array<i64: 128, 128>}]} {
    %c128_i32 = arith.constant 128 : i32
    %0 = arith.muli %arg0, %c128_i32 : i32
    %c0_i32 = arith.constant 0 : i32
    %1 = arith.cmpi eq, %arg2, %c0_i32 : i32
    %2 = arith.extui %1 : i1 to i32
    %c0_i32_0 = arith.constant 0 : i32
    %3 = arith.cmpi ne, %2, %c0_i32_0 : i32
    scf.if %3 {
      %cst_10 = arith.constant 0.000000e+00 : f32
      %13 = vector.broadcast %cst_10 : f32 to vector<128x128xf32>
      %c0_11 = arith.constant 0 : index
      %c0_12 = arith.constant 0 : index
      %14 = vector.load %arg8[%c0_11, %c0_12] : memref<128x128xf32, #tpu.memory_space<vmem>>, vector<128x128xf32>
      tpu.vector_store %arg8[%c0_11, %c0_12], %13 {strides = array<i32>} : memref<128x128xf32, #tpu.memory_space<vmem>>, vector<128x128xf32>,
    } else {
    }
    %c0 = arith.constant 0 : index
    %c0_1 = arith.constant 0 : index
    %4 = vector.load %arg8[%c0, %c0_1] : memref<128x128xf32, #tpu.memory_space<vmem>>, vector<128x128xf32>
    %c0_2 = arith.constant 0 : index
    %c0_3 = arith.constant 0 : index
    %5 = vector.load %arg3[%c0_2, %c0_3] : memref<128x128xbf16, #tpu.memory_space<vmem>>, vector<128x128xbf16>
    %c0_4 = arith.constant 0 : index
    %c0_5 = arith.constant 0 : index
    %6 = vector.load %arg4[%c0_4, %c0_5] : memref<128x128xbf16, #tpu.memory_space<vmem>>, vector<128x128xbf16>
    %cst = arith.constant dense<0.000000e+00> : vector<128x128xf32>
    %7 = tpu.matmul %5, %6, %cst {dimension_numbers = #tpu.dot_dimension_numbers<[1], [0], [0], [1], [0, 0, 1, 1], [], []>} : vector<128x128xbf16>, vector<128x128xbf16>, vector<128x128xf32> -> vector<128x128xf32>
    %8 = arith.addf %4, %7 : vector<128x128xf32>
    %c0_6 = arith.constant 0 : index
    %c0_7 = arith.constant 0 : index
    %9 = vector.load %arg8[%c0_6, %c0_7] : memref<128x128xf32, #tpu.memory_space<vmem>>, vector<128x128xf32>
    tpu.vector_store %arg8[%c0_6, %c0_7], %8 {strides = array<i32>} : memref<128x128xf32, #tpu.memory_space<vmem>>, vector<128x128xf32>,
    %c0_i32_8 = arith.constant 0 : i32
    %10 = arith.cmpi eq, %arg2, %c0_i32_8 : i32
    %11 = arith.extui %10 : i1 to i32
    %c0_i32_9 = arith.constant 0 : i32
    %12 = arith.cmpi ne, %11, %c0_i32_9 : i32
    scf.if %12 {
      %c0_10 = arith.constant 0 : index
      %c0_11 = arith.constant 0 : index
      %13 = vector.load %arg5[%c0_10, %c0_11] : memref<128x1xf32, #tpu.memory_space<vmem>>, vector<128x1xf32>
      %c0_12 = arith.constant 0 : index
      %c0_13 = arith.constant 0 : index
      %14 = vector.load %arg6[%c0_12, %c0_13] : memref<1x128xf32, #tpu.memory_space<vmem>>, vector<1x128xf32>
      %c0_14 = arith.constant 0 : index
      %c0_15 = arith.constant 0 : index
      %15 = vector.load %arg8[%c0_14, %c0_15] : memref<128x128xf32, #tpu.memory_space<vmem>>, vector<128x128xf32>
      %cst_16 = arith.constant 2.000000e+00 : f32
      %16 = vector.broadcast %cst_16 : f32 to vector<128x128xf32>
      %17 = arith.mulf %16, %15 : vector<128x128xf32>
      %18 = vector.broadcast %14 : vector<1x128xf32> to vector<128x128xf32>
      %19 = arith.subf %18, %17 : vector<128x128xf32>
      %20 = vector.broadcast %13 : vector<128x1xf32> to vector<128x128xf32>
      %21 = arith.addf %20, %19 : vector<128x128xf32>
      %22 = tpu.iota {dimensions = array<i32: 0>} : vector<128x128xi32>
      %23 = vector.broadcast %0 : i32 to vector<128x128xi32>
      %24 = arith.addi %22, %23 : vector<128x128xi32>
      %c0_i32_17 = arith.constant 0 : i32
      %25 = vector.broadcast %c0_i32_17 : i32 to vector<128x128xi32>
      %26 = arith.cmpi eq, %24, %25 : vector<128x128xi32>
      %cst_18 = arith.constant 0x7F800000 : f32
      %27 = vector.broadcast %cst_18 : f32 to vector<128x128xf32>
      %28 = arith.select %26, %27, %21 : vector<128x128xi1>, vector<128x128xf32>
      %c0_19 = arith.constant 0 : index
      %c0_20 = arith.constant 0 : index
      %29 = vector.load %arg7[%c0_19, %c0_20] : memref<128x128xf32, #tpu.memory_space<vmem>>, vector<128x128xf32>
      tpu.vector_store %arg7[%c0_19, %c0_20], %28 {strides = array<i32>} : memref<128x128xf32, #tpu.memory_space<vmem>>, vector<128x128xf32>,
    } else {
    }
    return
  }
  func.func @transform_0(%arg0: i32, %arg1: i32, %arg2: i32) -> (i32, i32) {
    %c0_i32 = arith.constant 0 : i32
    return %arg0, %arg2 : i32, i32
  }
  func.func @transform_1(%arg0: i32, %arg1: i32, %arg2: i32) -> (i32, i32) {
    %c0_i32 = arith.constant 0 : i32
    return %arg2, %arg1 : i32, i32
  }
  func.func @transform_2(%arg0: i32, %arg1: i32, %arg2: i32) -> (i32, i32) {
    %c0_i32 = arith.constant 0 : i32
    %c0_i32_0 = arith.constant 0 : i32
    return %arg0, %c0_i32 : i32, i32
  }
  func.func @transform_3(%arg0: i32, %arg1: i32, %arg2: i32) -> (i32, i32) {
    %c0_i32 = arith.constant 0 : i32
    %c0_i32_0 = arith.constant 0 : i32
    return %c0_i32, %arg1 : i32, i32
  }
  func.func @transform_4(%arg0: i32, %arg1: i32, %arg2: i32) -> (i32, i32) {
    %c0_i32 = arith.constant 0 : i32
    return %arg0, %arg1 : i32, i32
  }
}

</mosaic_0001>

<llo_original>
// kernel: tpu_custom_call.1
$region0: #{tpu_custom_call.1}
  #allocation0 [shape = 'u32[]', space=smem, size = 0x4, offset = 0x4, fixed_abs, tag = 'smem constant byte address 0x4 - core index']
  #allocation1 [shape = 'u32[144,128]{1,0:T(1,128)}', space=vmem, size = 0x12000, scoped, tag = 'internal scratch']
  #allocation2 [shape = 'f32[128,128]{1,0:T(8,128)}', space=vmem, size = 0x10000, scoped, tag = 'scratch operand']
  %s0 = inlined_call_operand.vmem [shape: bf16[128,128], index: 0, kind: input, shape index: {}]
  %s1 = inlined_call_operand.vmem [shape: bf16[128,128], index: 1, kind: input, shape index: {}]
  %s2 = inlined_call_operand.vmem [shape: f32[128,1], index: 2, kind: input, shape index: {}]
  %s3 = inlined_call_operand.vmem [shape: f32[1,128], index: 3, kind: input, shape index: {}]
  %s4 = inlined_call_operand.hbm [shape: f32[128,128], index: 4, kind: output, shape index: {}]
  %s5 = sld [smem:[#allocation0]]
  $region34: #{tpu_custom_call.1} parent=0
    _
  %s7 = ssub.s32 1, %s5
  %s8 = scalar_select 0, %s7, %s5
  $region1: #{tpu_custom_call.1} parent=0
    #allocation3 [shape = 'u8[65536]{0}', space=vmem, size = 0x10000, scoped, tag = 'output window, operand 0, single buffered']
    #allocation4 [shape = 's32[1]{0}', space=sflag, size = 0x4, scoped, tag = 'scoped memory for tpu_custom_call.1']
    %9 = vsyncpa [#allocation4], 0
    // Predicated region
    $region2: #{tpu_custom_call.1} parent=1 // pred_check
      _
    $region3: #{tpu_custom_call.1} parent=1 // pred_check_branch
      %11 = sbr.rel (0) target = $region5
    $region4: #{tpu_custom_call.1} parent=1 // pred_region
      _
    $region5: #{tpu_custom_call.1} parent=1 // pred_fallthru
      _
    // Predicated region
    $region6: #{tpu_custom_call.1} parent=1 // pred_check
      _
    $region7: #{tpu_custom_call.1} parent=1 // pred_check_branch
      %13 = sbr.rel (0) target = $region9
    $region8: #{tpu_custom_call.1} parent=1 // pred_region
      _
    $region9: #{tpu_custom_call.1} parent=1 // pred_fallthru
      _
    // Predicated region
    $region10: #{tpu_custom_call.1} parent=1 // pred_check
      _
    $region11: #{tpu_custom_call.1} parent=1 // pred_check_branch
      %15 = sbr.rel (0) target = $region13
    $region12: #{tpu_custom_call.1} parent=1 // pred_region
      _
    $region13: #{tpu_custom_call.1} parent=1 // pred_fallthru
      _
    // Predicated region
    $region14: #{tpu_custom_call.1} parent=1 // pred_check
      _
    $region15: #{tpu_custom_call.1} parent=1 // pred_check_branch
      %17 = sbr.rel (0) target = $region17
    $region16: #{tpu_custom_call.1} parent=1 // pred_region
      _
    $region17: #{tpu_custom_call.1} parent=1 // pred_fallthru
      _
    %s19 = smul.u32 0, 128
    %p20 = scmp.eq.s32.totalorder 0, 0
    // Predicated region
    $region18: #{tpu_custom_call.1} parent=1 // pred_check
      %p21 = pneg %p20
    $region19: #{tpu_custom_call.1} parent=1 // pred_check_branch
      %23 = sbr.rel (%p21) target = $region21
    $region20: #{tpu_custom_call.1} parent=1 // pred_region
      %24 = vst [vmem:[#allocation2] sm:$0xff] 0.0
      %25 = vst [vmem:[#allocation2 + $0x8] sm:$0xff] 0.0
      %26 = vst [vmem:[#allocation2 + $0x10] sm:$0xff] 0.0
      %27 = vst [vmem:[#allocation2 + $0x18] sm:$0xff] 0.0
      %28 = vst [vmem:[#allocation2 + $0x20] sm:$0xff] 0.0
      %29 = vst [vmem:[#allocation2 + $0x28] sm:$0xff] 0.0
      %30 = vst [vmem:[#allocation2 + $0x30] sm:$0xff] 0.0
      %31 = vst [vmem:[#allocation2 + $0x38] sm:$0xff] 0.0
      %32 = vst [vmem:[#allocation2 + $0x40] sm:$0xff] 0.0
      %33 = vst [vmem:[#allocation2 + $0x48] sm:$0xff] 0.0
      %34 = vst [vmem:[#allocation2 + $0x50] sm:$0xff] 0.0
      %35 = vst [vmem:[#allocation2 + $0x58] sm:$0xff] 0.0
      %36 = vst [vmem:[#allocation2 + $0x60] sm:$0xff] 0.0
      %37 = vst [vmem:[#allocation2 + $0x68] sm:$0xff] 0.0
      %38 = vst [vmem:[#allocation2 + $0x70] sm:$0xff] 0.0
      %39 = vst [vmem:[#allocation2 + $0x78] sm:$0xff] 0.0
    $region21: #{tpu_custom_call.1} parent=1 // pred_fallthru
      _
    %v40 = vld [vmem:[#allocation2] sm:$0xff]
    %v41 = vld [vmem:[#allocation2 + $0x8] sm:$0xff]
    %v42 = vld [vmem:[#allocation2 + $0x10] sm:$0xff]
    %v43 = vld [vmem:[#allocation2 + $0x18] sm:$0xff]
    %v44 = vld [vmem:[#allocation2 + $0x20] sm:$0xff]
    %v45 = vld [vmem:[#allocation2 + $0x28] sm:$0xff]
    %v46 = vld [vmem:[#allocation2 + $0x30] sm:$0xff]
    %v47 = vld [vmem:[#allocation2 + $0x38] sm:$0xff]
    %v48 = vld [vmem:[#allocation2 + $0x40] sm:$0xff]
    %v49 = vld [vmem:[#allocation2 + $0x48] sm:$0xff]
    %v50 = vld [vmem:[#allocation2 + $0x50] sm:$0xff]
    %v51 = vld [vmem:[#allocation2 + $0x58] sm:$0xff]
    %v52 = vld [vmem:[#allocation2 + $0x60] sm:$0xff]
    %v53 = vld [vmem:[#allocation2 + $0x68] sm:$0xff]
    %v54 = vld [vmem:[#allocation2 + $0x70] sm:$0xff]
    %v55 = vld [vmem:[#allocation2 + $0x78] sm:$0xff]
    %v56 = vld [vmem:[%s0] sm:$0xf]
    %v57 = vld [vmem:[%s0 + $0x4] sm:$0xf]
    %v58 = vld [vmem:[%s0 + $0x8] sm:$0xf]
    %v59 = vld [vmem:[%s0 + $0xc] sm:$0xf]
    %v60 = vld [vmem:[%s0 + $0x10] sm:$0xf]
    %v61 = vld [vmem:[%s0 + $0x14] sm:$0xf]
    %v62 = vld [vmem:[%s0 + $0x18] sm:$0xf]
    %v63 = vld [vmem:[%s0 + $0x1c] sm:$0xf]
    %v64 = vld [vmem:[%s0 + $0x20] sm:$0xf]
    %v65 = vld [vmem:[%s0 + $0x24] sm:$0xf]
    %v66 = vld [vmem:[%s0 + $0x28] sm:$0xf]
    %v67 = vld [vmem:[%s0 + $0x2c] sm:$0xf]
    %v68 = vld [vmem:[%s0 + $0x30] sm:$0xf]
    %v69 = vld [vmem:[%s0 + $0x34] sm:$0xf]
    %v70 = vld [vmem:[%s0 + $0x38] sm:$0xf]
    %v71 = vld [vmem:[%s0 + $0x3c] sm:$0xf]
    %v72 = vld [vmem:[%s1] sm:$0xf]
    %v73 = vld [vmem:[%s1 + $0x4] sm:$0xf]
    %v74 = vld [vmem:[%s1 + $0x8] sm:$0xf]
    %v75 = vld [vmem:[%s1 + $0xc] sm:$0xf]
    %v76 = vld [vmem:[%s1 + $0x10] sm:$0xf]
    %v77 = vld [vmem:[%s1 + $0x14] sm:$0xf]
    %v78 = vld [vmem:[%s1 + $0x18] sm:$0xf]
    %v79 = vld [vmem:[%s1 + $0x1c] sm:$0xf]
    %v80 = vld [vmem:[%s1 + $0x20] sm:$0xf]
    %v81 = vld [vmem:[%s1 + $0x24] sm:$0xf]
    %v82 = vld [vmem:[%s1 + $0x28] sm:$0xf]
    %v83 = vld [vmem:[%s1 + $0x2c] sm:$0xf]
    %v84 = vld [vmem:[%s1 + $0x30] sm:$0xf]
    %v85 = vld [vmem:[%s1 + $0x34] sm:$0xf]
    %v86 = vld [vmem:[%s1 + $0x38] sm:$0xf]
    %v87 = vld [vmem:[%s1 + $0x3c] sm:$0xf]
    %v104 = vunpack.c.l.b16 %v56
    %v105 = vunpack.c.l.b16 %v57
    %v106 = vunpack.c.l.b16 %v58
    %v107 = vunpack.c.l.b16 %v59
    %v108 = vunpack.c.l.b16 %v60
    %v109 = vunpack.c.l.b16 %v61
    %v110 = vunpack.c.l.b16 %v62
    %v111 = vunpack.c.l.b16 %v63
    %v112 = vunpack.c.l.b16 %v64
    %v113 = vunpack.c.l.b16 %v65
    %v114 = vunpack.c.l.b16 %v66
    %v115 = vunpack.c.l.b16 %v67
    %v116 = vunpack.c.l.b16 %v68
    %v117 = vunpack.c.l.b16 %v69
    %v118 = vunpack.c.l.b16 %v70
    %v119 = vunpack.c.l.b16 %v71
    %v120 = vpack.c.b16 %v105, %v104
    %v121 = vpack.c.b16 %v107, %v106
    %v122 = vpack.c.b16 %v109, %v108
    %v123 = vpack.c.b16 %v111, %v110
    %v124 = vpack.c.b16 %v113, %v112
    %v125 = vpack.c.b16 %v115, %v114
    %v126 = vpack.c.b16 %v117, %v116
    %v127 = vpack.c.b16 %v119, %v118
    %v152 = vunpack.c.l.b16 %v72
    %v153 = vunpack.c.l.b16 %v73
    %v154 = vunpack.c.l.b16 %v74
    %v155 = vunpack.c.l.b16 %v75
    %v156 = vunpack.c.l.b16 %v76
    %v157 = vunpack.c.l.b16 %v77
    %v158 = vunpack.c.l.b16 %v78
    %v159 = vunpack.c.l.b16 %v79
    %v160 = vunpack.c.l.b16 %v80
    %v161 = vunpack.c.l.b16 %v81
    %v162 = vunpack.c.l.b16 %v82
    %v163 = vunpack.c.l.b16 %v83
    %v164 = vunpack.c.l.b16 %v84
    %v165 = vunpack.c.l.b16 %v85
    %v166 = vunpack.c.l.b16 %v86
    %v167 = vunpack.c.l.b16 %v87
    %v168 = vpack.c.b16 %v153, %v152
    %v169 = vpack.c.b16 %v155, %v154
    %v170 = vpack.c.b16 %v157, %v156
    %v171 = vpack.c.b16 %v159, %v158
    %v172 = vpack.c.b16 %v161, %v160
    %v173 = vpack.c.b16 %v163, %v162
    %v174 = vpack.c.b16 %v165, %v164
    %v175 = vpack.c.b16 %v167, %v166
    %184 = vmatprep.subr.bf16.mxu0 0
    %185 = vmatpush1.bf16.msra.mxu0 %v175
    %186 = vmatprep.subr.bf16.mxu0 0
    %187 = vmatpush1.bf16.msra.mxu0 %v174
    %188 = vmatprep.subr.bf16.mxu0 0
    %189 = vmatpush1.bf16.msra.mxu0 %v173
    %190 = vmatprep.subr.bf16.mxu0 0
    %191 = vmatpush1.bf16.msra.mxu0 %v172
    %192 = vmatprep.subr.bf16.mxu0 0
    %193 = vmatpush1.bf16.msra.mxu0 %v171
    %194 = vmatprep.subr.bf16.mxu0 0
    %195 = vmatpush1.bf16.msra.mxu0 %v170
    %196 = vmatprep.subr.bf16.mxu0 0
    %197 = vmatpush1.bf16.msra.mxu0 %v169
    %198 = vmatprep.subr.bf16.mxu0 0
    %199 = vmatpush1.bf16.msra.mxu0 %v168
    %200 = vmatprep.subr.bf16.mxu0 0
    %201 = vmatpush2.bf16.msra.mxu0 0
    %202 = vmatprep.subr.bf16.mxu0 0
    %203 = vmatpush2.bf16.msra.mxu0 0
    %204 = vmatprep.subr.bf16.mxu0 0
    %205 = vmatpush2.bf16.msra.mxu0 0
    %206 = vmatprep.subr.bf16.mxu0 0
    %207 = vmatpush2.bf16.msra.mxu0 0
    %208 = vmatprep.subr.bf16.mxu0 0
    %209 = vmatpush2.bf16.msra.mxu0 0
    %210 = vmatprep.subr.bf16.mxu0 0
    %211 = vmatpush2.bf16.msra.mxu0 0
    %212 = vmatprep.subr.bf16.mxu0 0
    %213 = vmatpush2.bf16.msra.mxu0 0
    %214 = vmatprep.subr.bf16.mxu0 0
    %215 = vmatpush2.bf16.msra.mxu0 0
    %216 = vmatprep.mubr.bf16.mxu0 0
    %217 = vmatmul.mubr.bf16.gmra.mxu0 %v120
    %v218 = vpop.f32.mrf.mxu0
    %v219 = vadd.f32 0.0, %v218
    %v220 = vpop.f32.mrf.mxu0
    %v221 = vpop.f32.mrf.mxu0
    %v222 = vadd.f32 0.0, %v221
    %v223 = vpop.f32.mrf.mxu0
    %224 = vmatprep.mubr.bf16.mxu0 0
    %225 = vmatmul.mubr.bf16.gmra.mxu0 %v121
    %v226 = vpop.f32.mrf.mxu0
    %v227 = vadd.f32 0.0, %v226
    %v228 = vpop.f32.mrf.mxu0
    %v229 = vpop.f32.mrf.mxu0
    %v230 = vadd.f32 0.0, %v229
    %v231 = vpop.f32.mrf.mxu0
    %232 = vmatprep.mubr.bf16.mxu0 0
    %233 = vmatmul.mubr.bf16.gmra.mxu0 %v122
    %v234 = vpop.f32.mrf.mxu0
    %v235 = vadd.f32 0.0, %v234
    %v236 = vpop.f32.mrf.mxu0
    %v237 = vpop.f32.mrf.mxu0
    %v238 = vadd.f32 0.0, %v237
    %v239 = vpop.f32.mrf.mxu0
    %240 = vmatprep.mubr.bf16.mxu0 0
    %241 = vmatmul.mubr.bf16.gmra.mxu0 %v123
    %v242 = vpop.f32.mrf.mxu0
    %v243 = vadd.f32 0.0, %v242
    %v244 = vpop.f32.mrf.mxu0
    %v245 = vpop.f32.mrf.mxu0
    %v246 = vadd.f32 0.0, %v245
    %v247 = vpop.f32.mrf.mxu0
    %248 = vmatprep.mubr.bf16.mxu0 0
    %249 = vmatmul.mubr.bf16.gmra.mxu0 %v124
    %v250 = vpop.f32.mrf.mxu0
    %v251 = vadd.f32 0.0, %v250
    %v252 = vpop.f32.mrf.mxu0
    %v253 = vpop.f32.mrf.mxu0
    %v254 = vadd.f32 0.0, %v253
    %v255 = vpop.f32.mrf.mxu0
    %256 = vmatprep.mubr.bf16.mxu0 0
    %257 = vmatmul.mubr.bf16.gmra.mxu0 %v125
    %v258 = vpop.f32.mrf.mxu0
    %v259 = vadd.f32 0.0, %v258
    %v260 = vpop.f32.mrf.mxu0
    %v261 = vpop.f32.mrf.mxu0
    %v262 = vadd.f32 0.0, %v261
    %v263 = vpop.f32.mrf.mxu0
    %264 = vmatprep.mubr.bf16.mxu0 0
    %265 = vmatmul.mubr.bf16.gmra.mxu0 %v126
    %v266 = vpop.f32.mrf.mxu0
    %v267 = vadd.f32 0.0, %v266
    %v268 = vpop.f32.mrf.mxu0
    %v269 = vpop.f32.mrf.mxu0
    %v270 = vadd.f32 0.0, %v269
    %v271 = vpop.f32.mrf.mxu0
    %272 = vmatprep.mubr.bf16.mxu0 0
    %273 = vmatmul.mubr.bf16.gmra.mxu0 %v127
    %v274 = vpop.f32.mrf.mxu0
    %v275 = vadd.f32 0.0, %v274
    %v276 = vpop.f32.mrf.mxu0
    %v277 = vpop.f32.mrf.mxu0
    %v278 = vadd.f32 0.0, %v277
    %v279 = vpop.f32.mrf.mxu0
    %280 = vdwg.mxu0
    %v281 = vadd.f32 %v40, %v219
    %v282 = vadd.f32 %v41, %v222
    %v283 = vadd.f32 %v42, %v227
    %v284 = vadd.f32 %v43, %v230
    %v285 = vadd.f32 %v44, %v235
    %v286 = vadd.f32 %v45, %v238
    %v287 = vadd.f32 %v46, %v243
    %v288 = vadd.f32 %v47, %v246
    %v289 = vadd.f32 %v48, %v251
    %v290 = vadd.f32 %v49, %v254
    %v291 = vadd.f32 %v50, %v259
    %v292 = vadd.f32 %v51, %v262
    %v293 = vadd.f32 %v52, %v267
    %v294 = vadd.f32 %v53, %v270
    %v295 = vadd.f32 %v54, %v275
    %v296 = vadd.f32 %v55, %v278
    %297 = vst [vmem:[#allocation2] sm:$0xff] %v281
    %298 = vst [vmem:[#allocation2 + $0x8] sm:$0xff] %v282
    %299 = vst [vmem:[#allocation2 + $0x10] sm:$0xff] %v283
    %300 = vst [vmem:[#allocation2 + $0x18] sm:$0xff] %v284
    %301 = vst [vmem:[#allocation2 + $0x20] sm:$0xff] %v285
    %302 = vst [vmem:[#allocation2 + $0x28] sm:$0xff] %v286
    %303 = vst [vmem:[#allocation2 + $0x30] sm:$0xff] %v287
    %304 = vst [vmem:[#allocation2 + $0x38] sm:$0xff] %v288
    %305 = vst [vmem:[#allocation2 + $0x40] sm:$0xff] %v289
    %306 = vst [vmem:[#allocation2 + $0x48] sm:$0xff] %v290
    %307 = vst [vmem:[#allocation2 + $0x50] sm:$0xff] %v291
    %308 = vst [vmem:[#allocation2 + $0x58] sm:$0xff] %v292
    %309 = vst [vmem:[#allocation2 + $0x60] sm:$0xff] %v293
    %310 = vst [vmem:[#allocation2 + $0x68] sm:$0xff] %v294
    %311 = vst [vmem:[#allocation2 + $0x70] sm:$0xff] %v295
    %312 = vst [vmem:[#allocation2 + $0x78] sm:$0xff] %v296
    // Predicated region
    $region22: #{tpu_custom_call.1} parent=1 // pred_check
      %p313 = pneg %p20
    $region23: #{tpu_custom_call.1} parent=1 // pred_check_branch
      %315 = sbr.rel (%p313) target = $region25
    $region24: #{tpu_custom_call.1} parent=1 // pred_region
      %v316 = vld [vmem:[%s2] sm:$0xff]
      %v317 = vld [vmem:[%s2 + $0x8] sm:$0xff]
      %v318 = vld [vmem:[%s2 + $0x10] sm:$0xff]
      %v319 = vld [vmem:[%s2 + $0x18] sm:$0xff]
      %v320 = vld [vmem:[%s2 + $0x20] sm:$0xff]
      %v321 = vld [vmem:[%s2 + $0x28] sm:$0xff]
      %v322 = vld [vmem:[%s2 + $0x30] sm:$0xff]
      %v323 = vld [vmem:[%s2 + $0x38] sm:$0xff]
      %v324 = vld [vmem:[%s2 + $0x40] sm:$0xff]
      %v325 = vld [vmem:[%s2 + $0x48] sm:$0xff]
      %v326 = vld [vmem:[%s2 + $0x50] sm:$0xff]
      %v327 = vld [vmem:[%s2 + $0x58] sm:$0xff]
      %v328 = vld [vmem:[%s2 + $0x60] sm:$0xff]
      %v329 = vld [vmem:[%s2 + $0x68] sm:$0xff]
      %v330 = vld [vmem:[%s2 + $0x70] sm:$0xff]
      %v331 = vld [vmem:[%s2 + $0x78] sm:$0xff]
      %v332 = vld [vmem:[%s3] sm:$0x1]
      %v333 = vld [vmem:[#allocation2] sm:$0xff]
      %v334 = vld [vmem:[#allocation2 + $0x8] sm:$0xff]
      %v335 = vld [vmem:[#allocation2 + $0x10] sm:$0xff]
      %v336 = vld [vmem:[#allocation2 + $0x18] sm:$0xff]
      %v337 = vld [vmem:[#allocation2 + $0x20] sm:$0xff]
      %v338 = vld [vmem:[#allocation2 + $0x28] sm:$0xff]
      %v339 = vld [vmem:[#allocation2 + $0x30] sm:$0xff]
      %v340 = vld [vmem:[#allocation2 + $0x38] sm:$0xff]
      %v341 = vld [vmem:[#allocation2 + $0x40] sm:$0xff]
      %v342 = vld [vmem:[#allocation2 + $0x48] sm:$0xff]
      %v343 = vld [vmem:[#allocation2 + $0x50] sm:$0xff]
      %v344 = vld [vmem:[#allocation2 + $0x58] sm:$0xff]
      %v345 = vld [vmem:[#allocation2 + $0x60] sm:$0xff]
      %v346 = vld [vmem:[#allocation2 + $0x68] sm:$0xff]
      %v347 = vld [vmem:[#allocation2 + $0x70] sm:$0xff]
      %v348 = vld [vmem:[#allocation2 + $0x78] sm:$0xff]
      %v349 = vmul.f32 %v333, 2.0
      %v350 = vmul.f32 %v334, 2.0
      %v351 = vmul.f32 %v335, 2.0
      %v352 = vmul.f32 %v336, 2.0
      %v353 = vmul.f32 %v337, 2.0
      %v354 = vmul.f32 %v338, 2.0
      %v355 = vmul.f32 %v339, 2.0
      %v356 = vmul.f32 %v340, 2.0
      %v357 = vmul.f32 %v341, 2.0
      %v358 = vmul.f32 %v342, 2.0
      %v359 = vmul.f32 %v343, 2.0
      %v360 = vmul.f32 %v344, 2.0
      %v361 = vmul.f32 %v345, 2.0
      %v362 = vmul.f32 %v346, 2.0
      %v363 = vmul.f32 %v347, 2.0
      %v364 = vmul.f32 %v348, 2.0
      %v366 = vlaneseq
      %v367 = vshrl.u32 %v366, 7
      %v368 = vsub.s32 0, %v367
      %v369 = vrot.slane %v332, %v368
      %v371 = vsub.f32 %v369, %v349
      %v372 = vsub.f32 %v369, %v350
      %v373 = vsub.f32 %v369, %v351
      %v374 = vsub.f32 %v369, %v352
      %v375 = vsub.f32 %v369, %v353
      %v376 = vsub.f32 %v369, %v354
      %v377 = vsub.f32 %v369, %v355
      %v378 = vsub.f32 %v369, %v356
      %v379 = vsub.f32 %v369, %v357
      %v380 = vsub.f32 %v369, %v358
      %v381 = vsub.f32 %v369, %v359
      %v382 = vsub.f32 %v369, %v360
      %v383 = vsub.f32 %v369, %v361
      %v384 = vsub.f32 %v369, %v362
      %v385 = vsub.f32 %v369, %v363
      %v386 = vsub.f32 %v369, %v364
      %388 = vset.pattern.permute.xlu0 0
      %389 = vperm.xlu0 %388, %v316
      %v390 = vpop.permute.xlu0 %389
      %393 = vset.pattern.permute.xlu0 0
      %394 = vperm.xlu0 %393, %v317
      %v395 = vpop.permute.xlu0 %394
      %398 = vset.pattern.permute.xlu0 0
      %399 = vperm.xlu0 %398, %v318
      %v400 = vpop.permute.xlu0 %399
      %403 = vset.pattern.permute.xlu0 0
      %404 = vperm.xlu0 %403, %v319
      %v405 = vpop.permute.xlu0 %404
      %408 = vset.pattern.permute.xlu0 0
      %409 = vperm.xlu0 %408, %v320
      %v410 = vpop.permute.xlu0 %409
      %413 = vset.pattern.permute.xlu0 0
      %414 = vperm.xlu0 %413, %v321
      %v415 = vpop.permute.xlu0 %414
      %418 = vset.pattern.permute.xlu0 0
      %419 = vperm.xlu0 %418, %v322
      %v420 = vpop.permute.xlu0 %419
      %423 = vset.pattern.permute.xlu0 0
      %424 = vperm.xlu0 %423, %v323
      %v425 = vpop.permute.xlu0 %424
      %428 = vset.pattern.permute.xlu0 0
      %429 = vperm.xlu0 %428, %v324
      %v430 = vpop.permute.xlu0 %429
      %433 = vset.pattern.permute.xlu0 0
      %434 = vperm.xlu0 %433, %v325
      %v435 = vpop.permute.xlu0 %434
      %438 = vset.pattern.permute.xlu0 0
      %439 = vperm.xlu0 %438, %v326
      %v440 = vpop.permute.xlu0 %439
      %443 = vset.pattern.permute.xlu0 0
      %444 = vperm.xlu0 %443, %v327
      %v445 = vpop.permute.xlu0 %444
      %448 = vset.pattern.permute.xlu0 0
      %449 = vperm.xlu0 %448, %v328
      %v450 = vpop.permute.xlu0 %449
      %453 = vset.pattern.permute.xlu0 0
      %454 = vperm.xlu0 %453, %v329
      %v455 = vpop.permute.xlu0 %454
      %458 = vset.pattern.permute.xlu0 0
      %459 = vperm.xlu0 %458, %v330
      %v460 = vpop.permute.xlu0 %459
      %463 = vset.pattern.permute.xlu0 0
      %464 = vperm.xlu0 %463, %v331
      %v465 = vpop.permute.xlu0 %464
      %v467 = vadd.f32 %v390, %v371
      %v468 = vadd.f32 %v395, %v372
      %v469 = vadd.f32 %v400, %v373
      %v470 = vadd.f32 %v405, %v374
      %v471 = vadd.f32 %v410, %v375
      %v472 = vadd.f32 %v415, %v376
      %v473 = vadd.f32 %v420, %v377
      %v474 = vadd.f32 %v425, %v378
      %v475 = vadd.f32 %v430, %v379
      %v476 = vadd.f32 %v435, %v380
      %v477 = vadd.f32 %v440, %v381
      %v478 = vadd.f32 %v445, %v382
      %v479 = vadd.f32 %v450, %v383
      %v480 = vadd.f32 %v455, %v384
      %v481 = vadd.f32 %v460, %v385
      %v482 = vadd.f32 %v465, %v386
      %v483 = vlaneseq
      %v484 = vshrl.u32 %v483, 7
      %v485 = vadd.s32 %v484, 8
      %v486 = vadd.s32 %v484, 16
      %v487 = vadd.s32 %v484, 24
      %v488 = vadd.s32 %v484, 32
      %v489 = vadd.s32 %v484, 40
      %v490 = vadd.s32 %v484, 48
      %v491 = vadd.s32 %v484, 56
      %v492 = vadd.s32 %v484, 64
      %v493 = vadd.s32 %v484, 72
      %v494 = vadd.s32 %v484, 80
      %v495 = vadd.s32 %v484, 88
      %v496 = vadd.s32 %v484, 96
      %v497 = vadd.s32 %v484, 104
      %v498 = vadd.s32 %v484, 112
      %v499 = vadd.s32 %v484, 120
      %v500 = vstv %s19
      %v501 = vadd.s32 %v484, %v500
      %v502 = vadd.s32 %v485, %v500
      %v503 = vadd.s32 %v486, %v500
      %v504 = vadd.s32 %v487, %v500
      %v505 = vadd.s32 %v488, %v500
      %v506 = vadd.s32 %v489, %v500
      %v507 = vadd.s32 %v490, %v500
      %v508 = vadd.s32 %v491, %v500
      %v509 = vadd.s32 %v492, %v500
      %v510 = vadd.s32 %v493, %v500
      %v511 = vadd.s32 %v494, %v500
      %v512 = vadd.s32 %v495, %v500
      %v513 = vadd.s32 %v496, %v500
      %v514 = vadd.s32 %v497, %v500
      %v515 = vadd.s32 %v498, %v500
      %v516 = vadd.s32 %v499, %v500
      %vm517 = vcmp.eq.s32.totalorder %v501, 0
      %vm518 = vcmp.eq.s32.totalorder %v502, 0
      %vm519 = vcmp.eq.s32.totalorder %v503, 0
      %vm520 = vcmp.eq.s32.totalorder %v504, 0
      %vm521 = vcmp.eq.s32.totalorder %v505, 0
      %vm522 = vcmp.eq.s32.totalorder %v506, 0
      %vm523 = vcmp.eq.s32.totalorder %v507, 0
      %vm524 = vcmp.eq.s32.totalorder %v508, 0
      %vm525 = vcmp.eq.s32.totalorder %v509, 0
      %vm526 = vcmp.eq.s32.totalorder %v510, 0
      %vm527 = vcmp.eq.s32.totalorder %v511, 0
      %vm528 = vcmp.eq.s32.totalorder %v512, 0
      %vm529 = vcmp.eq.s32.totalorder %v513, 0
      %vm530 = vcmp.eq.s32.totalorder %v514, 0
      %vm531 = vcmp.eq.s32.totalorder %v515, 0
      %vm532 = vcmp.eq.s32.totalorder %v516, 0
      %v533 = vsel %vm517, inf, %v467
      %v534 = vsel %vm518, inf, %v468
      %v535 = vsel %vm519, inf, %v469
      %v536 = vsel %vm520, inf, %v470
      %v537 = vsel %vm521, inf, %v471
      %v538 = vsel %vm522, inf, %v472
      %v539 = vsel %vm523, inf, %v473
      %v540 = vsel %vm524, inf, %v474
      %v541 = vsel %vm525, inf, %v475
      %v542 = vsel %vm526, inf, %v476
      %v543 = vsel %vm527, inf, %v477
      %v544 = vsel %vm528, inf, %v478
      %v545 = vsel %vm529, inf, %v479
      %v546 = vsel %vm530, inf, %v480
      %v547 = vsel %vm531, inf, %v481
      %v548 = vsel %vm532, inf, %v482
      %549 = vst [vmem:[#allocation3] sm:$0xff] %v533
      %550 = vst [vmem:[#allocation3 + $0x8] sm:$0xff] %v534
      %551 = vst [vmem:[#allocation3 + $0x10] sm:$0xff] %v535
      %552 = vst [vmem:[#allocation3 + $0x18] sm:$0xff] %v536
      %553 = vst [vmem:[#allocation3 + $0x20] sm:$0xff] %v537
      %554 = vst [vmem:[#allocation3 + $0x28] sm:$0xff] %v538
      %555 = vst [vmem:[#allocation3 + $0x30] sm:$0xff] %v539
      %556 = vst [vmem:[#allocation3 + $0x38] sm:$0xff] %v540
      %557 = vst [vmem:[#allocation3 + $0x40] sm:$0xff] %v541
      %558 = vst [vmem:[#allocation3 + $0x48] sm:$0xff] %v542
      %559 = vst [vmem:[#allocation3 + $0x50] sm:$0xff] %v543
      %560 = vst [vmem:[#allocation3 + $0x58] sm:$0xff] %v544
      %561 = vst [vmem:[#allocation3 + $0x60] sm:$0xff] %v545
      %562 = vst [vmem:[#allocation3 + $0x68] sm:$0xff] %v546
      %563 = vst [vmem:[#allocation3 + $0x70] sm:$0xff] %v547
      %564 = vst [vmem:[#allocation3 + $0x78] sm:$0xff] %v548
    $region25: #{tpu_custom_call.1} parent=1 // pred_fallthru
      _
    // Predicated region
    $region26: #{tpu_custom_call.1} parent=1 // pred_check
      _
    $region27: #{tpu_custom_call.1} parent=1 // pred_check_branch
      %566 = sbr.rel (0) target = $region29
    $region28: #{tpu_custom_call.1} parent=1 // pred_region
      %s568 = ssub.s32 2048, 2048
      %569 = vsyncadd [#allocation4], %s568
      %s570 = sshll.u32 [#allocation3], 4
      %s571 = int_to_ptr.vmem [resolvable:$true] %s570
      %576 = dma.vmem_to_hbm [thread:$0]  %s571, 2048, %s4, [#allocation4], 128, 128, 8
    $region29: #{tpu_custom_call.1} parent=1 // pred_fallthru
      _
    // Predicated region
    $region30: #{tpu_custom_call.1} parent=1 // pred_check
      _
    $region31: #{tpu_custom_call.1} parent=1 // pred_check_branch
      %578 = sbr.rel (0) target = $region33
    $region32: #{tpu_custom_call.1} parent=1 // pred_region
      %579 = dma.done [#allocation4], 2048
    $region33: #{tpu_custom_call.1} parent=1 // pred_fallthru
      _
    %580 = vsyncpa [#allocation4], 1

</llo_original>
